<compile_context>
chip_gen: v5e
topology: v5e:2x2
jax: 0.10.0
libtpu: 0.0.40
codegen_flags: <defaults>
</compile_context>

<pallas_src>
import time
from functools import partial

import numpy as np
import jax
import jax.numpy as jnp
from jax.experimental import pallas as pl
from jax.experimental.pallas import tpu as pltpu


# ----------------------------------------------------------------------------
# Host-side grid construction (pure python/numpy, mirrors the torch module)
# ----------------------------------------------------------------------------
class HexagonalGrid:
    def __init__(self, image_size: int, hex_radius: float):
        self.image_size = image_size
        self.hex_radius = hex_radius
        self.hex_height = np.sqrt(3) * hex_radius
        self.hex_width = 2 * hex_radius
        self.centers = self._generate_hex_centers()
        self.num_hexagons = len(self.centers)

    def _generate_hex_centers(self):
        centers = []
        col_spacing = 1.5 * self.hex_radius
        row_spacing = self.hex_height
        n_cols = int(np.ceil(self.image_size / col_spacing)) + 1
        n_rows = int(np.ceil(self.image_size / row_spacing)) + 1
        for col in range(n_cols):
            for row in range(n_rows):
                x = col * col_spacing
                y = row * row_spacing
                if col % 2 == 1:
                    y += row_spacing / 2
                if -self.hex_radius <= x <= self.image_size + self.hex_radius:
                    if -self.hex_radius <= y <= self.image_size + self.hex_radius:
                        centers.append((x, y))
        return centers


def _bilinear_resize_matrix(out_size: int, in_size: int) -> np.ndarray:
    """Row-weight matrix reproducing F.interpolate(bilinear, align_corners=False)."""
    M = np.zeros((out_size, in_size), dtype=np.float32)
    if in_size == out_size:
        np.fill_diagonal(M, 1.0)
        return M
    scale = in_size / out_size
    for i in range(out_size):
        src = (i + 0.5) * scale - 0.5
        if src < 0.0:
            src = 0.0
        i0 = int(np.floor(src))
        if i0 > in_size - 1:
            i0 = in_size - 1
        i1 = i0 + 1 if i0 < in_size - 1 else i0
        l1 = src - i0
        l0 = 1.0 - l1
        M[i, i0] += l0
        M[i, i1] += l1
    return M


def build_hex_weights(grid: HexagonalGrid, patch_size: int, H: int, W: int):
    """Per-hexagon row/col extraction+resize matrices and host-side stats."""
    N = grid.num_hexagons
    r = grid.hex_radius
    RW = np.zeros((N, patch_size, H), dtype=np.float32)
    CW = np.zeros((N, patch_size, W), dtype=np.float32)
    valid, boundary = 0, 0
    for idx, (cx, cy) in enumerate(grid.centers):
        x1 = int(max(0, cx - r)); x2 = int(min(W, cx + r))
        y1 = int(max(0, cy - r)); y2 = int(min(H, cy + r))
        if x2 > x1 and y2 > y1:
            h, w = y2 - y1, x2 - x1
            if h != patch_size or w != patch_size:
                boundary += 1
            RW[idx, :, y1:y2] = _bilinear_resize_matrix(patch_size, h)
            CW[idx, :, x1:x2] = _bilinear_resize_matrix(patch_size, w)
            valid += 1
        # else: rows stay zero -> patch stays zero (matches torch.zeros init)
    return RW, CW, valid, boundary


# ----------------------------------------------------------------------------
# Tiling helpers
# ----------------------------------------------------------------------------
def _round_up(x: int, m: int) -> int:
    return ((x + m - 1) // m) * m


def _tile_m(M: int) -> int:
    # 16-row multiples so bf16 operand tiles are full packed (16,128) vregs.
    return min(_round_up(M, 16), 256)


def _tile_k(K: int) -> int:
    # Small TK keeps the K-band granularity fine; band blocks are stored contiguously
    # so each weight DMA is still a single contiguous TK*TN*2-byte transfer.
    Kp0 = _round_up(K, 128)
    return 128 if Kp0 > 128 else Kp0


def _tile_n(n_out: int) -> int:
    Np0 = _round_up(n_out, 128)
    if Np0 <= 128:
        return Np0
    # Prefer >= 2 N tiles (v7x shards the "parallel" axes over its 2 TensorCores) with
    # minimal zero padding; TN capped at 512 so double-buffered bf16 weight tiles stay
    # far under the 16/32 MiB default scoped VMEM limits (v5e/v6e/v7x).
    for tn in (512, 384, 256, 128):
        if Np0 % tn == 0 and Np0 // tn >= 2:
            return tn
    for tn in (512, 384, 256, 128):
        if _round_up(Np0, tn) // tn >= 2:
            return tn
    return Np0


# ----------------------------------------------------------------------------
# Host build: band-compacted, x-major Kronecker weight + per-tile K-block tables
# ----------------------------------------------------------------------------
def build_banded_weights(grid: HexagonalGrid, patch_size: int, H: int, W: int):
    RW, CW, valid, boundary = build_hex_weights(grid, patch_size, H, W)
    N, ps = RW.shape[0], patch_size
    K, n_out = W * H, N * ps * ps                 # x-major: K index = x*H + y
    tk, tn = _tile_k(K), _tile_n(n_out)
    Kp, Np = _round_up(K, tk), _round_up(n_out, tn)

    # Dense x-major Kron weight (fine at toy scale).
    # TODO(synk): at large H*W assemble the per-hexagon bands directly (or switch to
    # the separable RW @ img @ CW^T two-matmul form) instead of materializing the full
    # dense Kronecker matrix on the host.
    wfull = np.einsum('npy,nqx->npqxy', RW, CW).reshape(n_out, K)
    wt = np.zeros((Kp, Np), dtype=np.float32)
    wt[:K, :n_out] = wfull.T                      # (K = x*H + y, n_out = n*ps^2+p*ps+q)

    num_n_tiles = Np // tn
    kbase = np.zeros((num_n_tiles,), dtype=np.int64)   # first K block of each tile's band
    kcount = np.ones((num_n_tiles,), dtype=np.int64)   # band length in K blocks (>= 1)
    for j in range(num_n_tiles):
        nz = np.nonzero(np.any(wt[:, j * tn:(j + 1) * tn] != 0.0, axis=1))[0]
        if nz.size:
            kb0, kb1 = int(nz[0]) // tk, int(nz[-1]) // tk
            kbase[j], kcount[j] = kb0, kb1 - kb0 + 1

    boff = np.zeros((num_n_tiles,), dtype=np.int64)    # row-block offset in band storage
    if num_n_tiles > 1:
        boff[1:] = np.cumsum(kcount)[:-1]
    tot_blocks = int(kcount.sum())
    max_kc = int(kcount.max())

    # Band-compacted weight: only each N tile's nonzero K band is stored, as contiguous
    # (tk, tn) blocks.  Streamed as bf16 (the GEMM is weight-bandwidth bound).
    wband = np.zeros((tot_blocks * tk, tn), dtype=np.float32)
    # Per-(N-tile, k-step) block-index tables (scalar prefetch, SMEM).  k-steps past a
    # tile's band clamp to the last block so the pipeline issues no new DMA for them.
    a_kidx = np.zeros((num_n_tiles * max_kc,), dtype=np.int32)
    b_kidx = np.zeros((num_n_tiles * max_kc,), dtype=np.int32)
    for j in range(num_n_tiles):
        kc = int(kcount[j])
        for kk in range(max_kc):
            ck = min(kk, kc - 1)
            a_kidx[j * max_kc + kk] = int(kbase[j]) + ck
            b_kidx[j * max_kc + kk] = int(boff[j]) + ck
        for kk in range(kc):
            src = wt[(int(kbase[j]) + kk) * tk:(int(kbase[j]) + kk + 1) * tk,
                     j * tn:(j + 1) * tn]
            dst = (int(boff[j]) + kk) * tk
            wband[dst:dst + tk, :] = src

    weights = dict(wband=wband, a_kidx=a_kidx, b_kidx=b_kidx,
                   kcount=kcount.astype(np.int32),
                   tk=tk, tn=tn, max_kc=max_kc, tot_blocks=tot_blocks)
    return weights, valid, boundary


# ----------------------------------------------------------------------------
# Pallas kernel: banded (block-sparse) matmul, f32 accumulation in the output tile
# ----------------------------------------------------------------------------
def _banded_matmul_kernel(a_kidx_ref, b_kidx_ref, kcount_ref, a_ref, b_ref, o_ref):
    j = pl.program_id(1)
    k = pl.program_id(2)

    @pl.when(k == 0)
    def _init():
        o_ref[...] = jnp.zeros_like(o_ref)

    # Output block index (i, j) is constant along k -> o_ref stays VMEM-resident and is
    # written back to HBM once; accumulate directly (no scratch accumulator / copy).
    @pl.when(k < kcount_ref[j])
    def _accumulate():
        o_ref[...] += jnp.dot(a_ref[...], b_ref[...],
                              preferred_element_type=jnp.float32)


@partial(jax.jit, static_argnames=("num_hexagons", "patch_size", "tk", "tn",
                                   "max_kc", "tot_kblocks"))
def hex_patch_extract(images, wband, a_kidx, b_kidx, kcount, *,
                      num_hexagons, patch_size, tk, tn, max_kc, tot_kblocks):
    B, C, H, W = images.shape
    ps = patch_size
    n_out = num_hexagons * ps * ps
    M, K = B * C, H * W

    tm = _tile_m(M)
    Mp, Kp = _round_up(M, tm), _round_up(K, tk)
    num_n_tiles = kcount.shape[0]
    Np = num_n_tiles * tn

    # x-major flatten: a[b*C+c, x*H+y] = images[b, c, y, x]; bf16 stream, f32 accumulate.
    a = jnp.transpose(images.astype(jnp.bfloat16), (0, 1, 3, 2)).reshape(M, K)
    if (Mp, Kp) != (M, K):                       # skip the pad copy when not needed
        a = jnp.pad(a, ((0, Mp - M), (0, Kp - K)))

    num_m_tiles = Mp // tm
    grid = (num_m_tiles, num_n_tiles, max_kc)

    def a_map(i, j, k, a_kidx_ref, b_kidx_ref, kcount_ref):
        return (i, a_kidx_ref[j * max_kc + k])

    def b_map(i, j, k, a_kidx_ref, b_kidx_ref, kcount_ref):
        return (b_kidx_ref[j * max_kc + k], 0)

    def o_map(i, j, k, a_kidx_ref, b_kidx_ref, kcount_ref):
        return (i, j)

    # Cost hint accounts for re-streaming: the weight band is read once per M tile and
    # the activation band once per N tile (bf16 operands, f32 output).
    real_steps = num_m_tiles * tot_kblocks
    cost = pl.CostEstimate(
        flops=2 * tm * tk * tn * real_steps,
        transcendentals=0,
        bytes_accessed=2 * tm * tk * real_steps + 2 * tk * tn * real_steps + 4 * Mp * Np)

    out = pl.pallas_call(
        _banded_matmul_kernel,
        out_shape=jax.ShapeDtypeStruct((Mp, Np), jnp.float32),
        grid_spec=pltpu.PrefetchScalarGridSpec(
            num_scalar_prefetch=3,
            grid=grid,
            in_specs=[
                pl.BlockSpec((tm, tk), a_map),
                pl.BlockSpec((tk, tn), b_map),
            ],
            out_specs=pl.BlockSpec((tm, tn), o_map),
        ),
        compiler_params=pltpu.CompilerParams(
            dimension_semantics=("parallel", "parallel", "arbitrary")),
        cost_estimate=cost,
    )(a_kidx, b_kidx, kcount, a, wband)

    out = out[:M, :n_out]
    # (B*C, N*ps*ps) -> (B, N, C*ps*ps); matches torch patch.flatten(1) order.
    # TODO(synk): consumers that accept (B, C, N, ps*ps) could skip this transpose.
    out = out.reshape(B, C, num_hexagons, ps * ps)
    out = jnp.transpose(out, (0, 2, 1, 3)).reshape(B, num_hexagons, C * ps * ps)
    return out


# ----------------------------------------------------------------------------
# Module wrapper
# ----------------------------------------------------------------------------
class HexagonalPatchExtractorPallas:
    def __init__(self, image_size: int, hex_radius: float):
        self.grid = HexagonalGrid(image_size, hex_radius)
        self.patch_size = int(2 * hex_radius)
        self._weight_cache = {}   # (H, W) -> dict of device arrays + static config

    def _weights_for(self, H, W):
        key = (H, W)
        if key not in self._weight_cache:
            w, valid, boundary = build_banded_weights(self.grid, self.patch_size, H, W)
            self._weight_cache[key] = dict(
                wband=jax.device_put(jnp.asarray(w['wband'], dtype=jnp.bfloat16)),
                a_kidx=jax.device_put(jnp.asarray(w['a_kidx'])),
                b_kidx=jax.device_put(jnp.asarray(w['b_kidx'])),
                kcount=jax.device_put(jnp.asarray(w['kcount'])),
                tk=w['tk'], tn=w['tn'], max_kc=w['max_kc'],
                tot_blocks=w['tot_blocks'], valid=valid, boundary=boundary)
        return self._weight_cache[key]

    def __call__(self, images: jax.Array):
        B, C, H, W = images.shape
        w = self._weights_for(H, W)
        start = time.time()
        patches = hex_patch_extract(
            images, w['wband'], w['a_kidx'], w['b_kidx'], w['kcount'],
            num_hexagons=self.grid.num_hexagons, patch_size=self.patch_size,
            tk=w['tk'], tn=w['tn'], max_kc=w['max_kc'], tot_kblocks=w['tot_blocks'])
        patches = jax.block_until_ready(patches)
        # TODO(synk): stats is a host-side python dict in the reference module; counts
        # are computed at weight-build time, extraction_time is the jitted-call wall
        # clock (compile excluded after the warm-up call).
        stats = {
            'valid_extractions': w['valid'],
            'boundary_cases': w['boundary'],
            'extraction_time': time.time() - start,
        }
        return patches, stats


# ----------------------------------------------------------------------------
# main
# ----------------------------------------------------------------------------
if __name__ == "__main__":
    image_size = 16
    hex_radius = 2.0
    B, C = 2, 4

    key = jax.random.PRNGKey(0)
    x = jax.random.normal(key, (B, C, image_size, image_size), dtype=jnp.float32)

    extractor = HexagonalPatchExtractorPallas(image_size, hex_radius)

    # warm-up: trace + compile + weight H2D happen here, not in the timed call
    _ = jax.block_until_ready(extractor(x)[0])

    patches, stats = extractor(x)
    patches = jax.block_until_ready(patches)

    # numpy reference of the same crop + bilinear-resize semantics
    RW, CW, _, _ = build_hex_weights(extractor.grid, extractor.patch_size,
                                     image_size, image_size)
    x_np = np.asarray(x, dtype=np.float32)
    ref = np.einsum('nph,bchw,nqw->bncpq', RW, x_np, CW).reshape(
        B, extractor.grid.num_hexagons, C * extractor.patch_size ** 2)

    assert patches.shape == ref.shape, (patches.shape, ref.shape)
    # Tolerance budget: every output is a convex combination of <= 4 pixels; bf16
    # storage of both operands gives abs error <= ~0.008 * max|x| (~0.03 for N(0,1)
    # inputs), comfortably inside atol/rtol = 5e-2.
    err = float(np.max(np.abs(np.asarray(patches) - ref)))
    assert np.allclose(np.asarray(patches), ref, atol=5e-2, rtol=5e-2), err

    print("KERNEL_OK")
</pallas_src>

<mosaic_0001>
module attributes {stable_mosaic.version = 11 : i64} {
  func.func @_banded_matmul_kernel(%arg0: i32, %arg1: i32, %arg2: i32, %arg3: memref<10xi32, #tpu.memory_space<smem>>, %arg4: memref<10xi32, #tpu.memory_space<smem>>, %arg5: memref<5xi32, #tpu.memory_space<smem>>, %arg6: memref<16x128xbf16, #tpu.memory_space<vmem>>, %arg7: memref<128x128xbf16, #tpu.memory_space<vmem>>, %arg8: memref<16x128xf32, #tpu.memory_space<vmem>>) attributes {dimension_semantics = [#tpu.dimension_semantics<parallel>, #tpu.dimension_semantics<parallel>, #tpu.dimension_semantics<arbitrary>], iteration_bounds = array<i64: 1, 5, 2>, scalar_prefetch = 3 : i64, scratch_operands = 0 : i64, tpu.core_type = #tpu.core_type<tc>, window_params = [{transform_indices = @transform_0, window_bounds = array<i64: 16, 128>}, {transform_indices = @transform_1, window_bounds = array<i64: 128, 128>}, {transform_indices = @transform_2, window_bounds = array<i64: 16, 128>}]} {
    %c0_i32 = arith.constant 0 : i32
    %0 = arith.cmpi eq, %arg2, %c0_i32 : i32
    %1 = arith.extui %0 : i1 to i32
    %c0_i32_0 = arith.constant 0 : i32
    %2 = arith.cmpi ne, %1, %c0_i32_0 : i32
    scf.if %2 {
      %cst = arith.constant 0.000000e+00 : f32
      %8 = vector.broadcast %cst : f32 to vector<16x128xf32>
      %c0 = arith.constant 0 : index
      %c0_2 = arith.constant 0 : index
      %9 = vector.load %arg8[%c0, %c0_2] : memref<16x128xf32, #tpu.memory_space<vmem>>, vector<16x128xf32>
      tpu.vector_store %arg8[%c0, %c0_2], %8 {strides = array<i32>} : memref<16x128xf32, #tpu.memory_space<vmem>>, vector<16x128xf32>,
    } else {
    }
    %3 = arith.index_cast %arg1 : i32 to index
    %4 = memref.load %arg5[%3] : memref<5xi32, #tpu.memory_space<smem>>
    %5 = arith.cmpi slt, %arg2, %4 : i32
    %6 = arith.extui %5 : i1 to i32
    %c0_i32_1 = arith.constant 0 : i32
    %7 = arith.cmpi ne, %6, %c0_i32_1 : i32
    scf.if %7 {
      %c0 = arith.constant 0 : index
      %c0_2 = arith.constant 0 : index
      %8 = vector.load %arg8[%c0, %c0_2] : memref<16x128xf32, #tpu.memory_space<vmem>>, vector<16x128xf32>
      %c0_3 = arith.constant 0 : index
      %c0_4 = arith.constant 0 : index
      %9 = vector.load %arg6[%c0_3, %c0_4] : memref<16x128xbf16, #tpu.memory_space<vmem>>, vector<16x128xbf16>
      %c0_5 = arith.constant 0 : index
      %c0_6 = arith.constant 0 : index
      %10 = vector.load %arg7[%c0_5, %c0_6] : memref<128x128xbf16, #tpu.memory_space<vmem>>, vector<128x128xbf16>
      %cst = arith.constant dense<0.000000e+00> : vector<16x128xf32>
      %11 = tpu.matmul %9, %10, %cst {dimension_numbers = #tpu.dot_dimension_numbers<[1], [0], [0], [1], [0, 0, 1, 1], [], []>} : vector<16x128xbf16>, vector<128x128xbf16>, vector<16x128xf32> -> vector<16x128xf32>
      %12 = arith.addf %8, %11 : vector<16x128xf32>
      %c0_7 = arith.constant 0 : index
      %c0_8 = arith.constant 0 : index
      %13 = vector.load %arg8[%c0_7, %c0_8] : memref<16x128xf32, #tpu.memory_space<vmem>>, vector<16x128xf32>
      tpu.vector_store %arg8[%c0_7, %c0_8], %12 {strides = array<i32>} : memref<16x128xf32, #tpu.memory_space<vmem>>, vector<16x128xf32>,
    } else {
    }
    return
  }
  func.func @transform_0(%arg0: i32, %arg1: i32, %arg2: i32, %arg3: memref<10xi32, #tpu.memory_space<smem>>, %arg4: memref<10xi32, #tpu.memory_space<smem>>, %arg5: memref<5xi32, #tpu.memory_space<smem>>) -> (i32, i32) {
    %c2_i32 = arith.constant 2 : i32
    %0 = arith.muli %arg1, %c2_i32 : i32
    %1 = arith.addi %0, %arg2 : i32
    %2 = arith.index_cast %1 : i32 to index
    %3 = memref.load %arg3[%2] : memref<10xi32, #tpu.memory_space<smem>>
    %c0_i32 = arith.constant 0 : i32
    return %arg0, %3 : i32, i32
  }
  func.func @transform_1(%arg0: i32, %arg1: i32, %arg2: i32, %arg3: memref<10xi32, #tpu.memory_space<smem>>, %arg4: memref<10xi32, #tpu.memory_space<smem>>, %arg5: memref<5xi32, #tpu.memory_space<smem>>) -> (i32, i32) {
    %c2_i32 = arith.constant 2 : i32
    %0 = arith.muli %arg1, %c2_i32 : i32
    %1 = arith.addi %0, %arg2 : i32
    %2 = arith.index_cast %1 : i32 to index
    %3 = memref.load %arg4[%2] : memref<10xi32, #tpu.memory_space<smem>>
    %c0_i32 = arith.constant 0 : i32
    %c0_i32_0 = arith.constant 0 : i32
    return %3, %c0_i32 : i32, i32
  }
  func.func @transform_2(%arg0: i32, %arg1: i32, %arg2: i32, %arg3: memref<10xi32, #tpu.memory_space<smem>>, %arg4: memref<10xi32, #tpu.memory_space<smem>>, %arg5: memref<5xi32, #tpu.memory_space<smem>>) -> (i32, i32) {
    %c0_i32 = arith.constant 0 : i32
    return %arg0, %arg1 : i32, i32
  }
}

</mosaic_0001>

<llo_original>
// kernel: hex_patch_extract.1
$region0: #{hex_patch_extract.1}
  #allocation0 [shape = 'u32[]', space=smem, size = 0x4, offset = 0x4, fixed_abs, tag = 'smem constant byte address 0x4 - core index']
  #allocation1 [shape = 'u32[72,128]{1,0:T(1,128)}', space=vmem, size = 0x9000, scoped, tag = 'internal scratch']
  #allocation2 [shape = 's32[1]{0}', space=sflag, size = 0x4, scoped, tag = 'scoped memory for hex_patch_extract.1']
  #allocation3 [shape = 'u8[512]{0}', space=smem, size = 0x200, scoped, tag = 'prefetched SMEM operand 0']
  #allocation4 [shape = 'u8[512]{0}', space=smem, size = 0x200, scoped, tag = 'prefetched SMEM operand 1']
  #allocation5 [shape = 'u8[512]{0}', space=smem, size = 0x200, scoped, tag = 'prefetched SMEM operand 2']
  %s0 = inlined_call_operand.vmem [shape: s32[10], index: 0, kind: input, shape index: {}]
  %s1 = inlined_call_operand.vmem [shape: s32[10], index: 1, kind: input, shape index: {}]
  %s2 = inlined_call_operand.vmem [shape: s32[5], index: 2, kind: input, shape index: {}]
  %s3 = inlined_call_operand.vmem [shape: bf16[16,256], index: 3, kind: input, shape index: {}]
  %s4 = inlined_call_operand.vmem [shape: bf16[768,128], index: 4, kind: input, shape index: {}]
  %s5 = inlined_call_operand.vmem [shape: f32[16,640], index: 5, kind: output, shape index: {}]
  %s6 = sld [smem:[#allocation0]]
  $region124: #{hex_patch_extract.1} parent=0
    _
  %s8 = ssub.s32 1, %s6
  %s9 = scalar_select 0, %s8, %s6
  %s11 = sshll.u32 %s0, 4
  %s12 = int_to_ptr.vmem [resolvable:$true] %s11
  %14 = dma.vmem_to_smem %s12, 16, [#allocation3], [#allocation2]
  %s16 = sshll.u32 %s1, 4
  %s17 = int_to_ptr.vmem [resolvable:$true] %s16
  %19 = dma.vmem_to_smem %s17, 16, [#allocation4], [#allocation2]
  %s21 = sshll.u32 %s2, 4
  %s22 = int_to_ptr.vmem [resolvable:$true] %s21
  %24 = dma.vmem_to_smem %s22, 16, [#allocation5], [#allocation2]
  %26 = dma.done [#allocation2], 48
  %27 = sfence
  $region1: #{hex_patch_extract.1} parent=0
    #allocation6 [shape = 'u8[8192]{0}', space=vmem, size = 0x2000, scoped, tag = 'input window, operand 3']
    #allocation7 [shape = 'u8[16384]{0}', space=vmem, size = 0x4000, scoped, tag = 'output window, operand 0']
    loop: start=0, step=1, limit=12
    $region2: #{hex_patch_extract.1} parent=1 // loop_pre_header
      _
    $region3: #{hex_patch_extract.1} parent=1 // loop_header
      %s29 = sphi 0, %s33
      %p30 = scmp.ge.s32.totalorder %s29, 12
      %s36 = sphi 0, %s55
      %s37 = sphi 0, %s51
      %s38 = sphi 0, %s47
      %s39 = sphi 0, %s36
      %s40 = sphi 0, %s37
      %s41 = sphi 0, %s38
      %s42 = sphi 0, %s39
      %s43 = sphi 0, %s40
      %s44 = sphi 0, %s41
      %s66 = sphi 0, %s68
      %s69 = sphi 0, %s66
      %s70 = sphi 0, %s69
      %s86 = sphi 0, %s70
      %s98 = sphi 0, %s100
      %s101 = sphi 0, %s98
      %s102 = sphi 0, %s101
      %s118 = sphi 0, %s102
      %s126 = sphi 0, %s128
      %s129 = sphi 0, %s126
      %s130 = sphi 0, %s129
      %s146 = sphi 0, %s130
    $region4: #{hex_patch_extract.1} parent=1 // loop_header_branch
      %32 = sbr.rel (%p30) target = $region8
    $region5: #{hex_patch_extract.1} parent=1 // loop_body
      %s34 = ssub.s32 %s29, 1
      %s35 = ssub.s32 %s29, 2
      %s45 = sadd.s32 1, %s38
      %p46 = scmp.ge.s32.totalorder %s45, 2
      %s47 = scalar_select %p46, 0, %s45
      %s48 = sadd.s32 1, %s37
      %s49 = scalar_select %p46, %s48, %s37
      %p50 = scmp.ge.s32.totalorder %s49, 5
      %s51 = scalar_select %p50, 0, %s49
      %s52 = sadd.s32 1, %s36
      %s53 = scalar_select %p50, %s52, %s36
      %p54 = scmp.ge.s32.totalorder %s53, 1
      %s55 = scalar_select %p54, 0, %s53
      %s56 = smul.u32 %s37, 2
      %s57 = sadd.s32 %s56, %s38
      %s58 = sld [smem:[#allocation3 + %s57]]
      %s59 = smul.u32 %s51, 2
      %s60 = sadd.s32 %s59, %s47
      %s61 = sld [smem:[#allocation3 + %s60]]
      %s62 = ssub.s32 %s36, %s55
      %s63 = ssub.s32 %s58, %s61
      %s64 = sor.u32 %s62, %s63
      %p65 = scmp.eq.s32.totalorder %s64, 0
      %s67 = sadd.s32 %s66, 1
      %s68 = scalar_select %p65, %s66, %s67
      %p71 = pneg %p65
      %p72 = scmp.eq.s32.totalorder %s29, 9
      %p73 = por %p71, %p72
      %p74 = scmp.ne.s32.totalorder %s66, %s69
      %p75 = scmp.eq.s32.totalorder %s29, 0
      %p76 = por %p74, %p75
      %p77 = scmp.ne.s32.totalorder %s66, %s69
      %p78 = scmp.eq.s32.totalorder %s34, 9
      %p79 = por %p77, %p78
      %p80 = scmp.ne.s32.totalorder %s69, %s70
      %p81 = scmp.eq.s32.totalorder %s34, 0
      %p82 = por %p80, %p81
      %p83 = scmp.ne.s32.totalorder %s69, %s70
      %p84 = scmp.eq.s32.totalorder %s35, 9
      %p85 = por %p83, %p84
      %p87 = scmp.ne.s32.totalorder %s70, %s86
      %p88 = scmp.eq.s32.totalorder %s35, 0
      %p89 = por %p87, %p88
      %s90 = smul.u32 %s37, 2
      %s91 = sadd.s32 %s90, %s38
      %s92 = sld [smem:[#allocation4 + %s91]]
      %s93 = smul.u32 %s51, 2
      %s94 = sadd.s32 %s93, %s47
      %s95 = sld [smem:[#allocation4 + %s94]]
      %s96 = ssub.s32 %s92, %s95
      %p97 = scmp.eq.s32.totalorder %s96, 0
      %s99 = sadd.s32 %s98, 1
      %s100 = scalar_select %p97, %s98, %s99
      %p103 = pneg %p97
      %p104 = scmp.eq.s32.totalorder %s29, 9
      %p105 = por %p103, %p104
      %p106 = scmp.ne.s32.totalorder %s98, %s101
      %p107 = scmp.eq.s32.totalorder %s29, 0
      %p108 = por %p106, %p107
      %p109 = scmp.ne.s32.totalorder %s98, %s101
      %p110 = scmp.eq.s32.totalorder %s34, 9
      %p111 = por %p109, %p110
      %p112 = scmp.ne.s32.totalorder %s101, %s102
      %p113 = scmp.eq.s32.totalorder %s34, 0
      %p114 = por %p112, %p113
      %p115 = scmp.ne.s32.totalorder %s101, %s102
      %p116 = scmp.eq.s32.totalorder %s35, 9
      %p117 = por %p115, %p116
      %p119 = scmp.ne.s32.totalorder %s102, %s118
      %p120 = scmp.eq.s32.totalorder %s35, 0
      %p121 = por %p119, %p120
      %s122 = ssub.s32 %s36, %s55
      %s123 = ssub.s32 %s37, %s51
      %s124 = sor.u32 %s122, %s123
      %p125 = scmp.eq.s32.totalorder %s124, 0
      %s127 = sadd.s32 %s126, 1
      %s128 = scalar_select %p125, %s126, %s127
      %p131 = pneg %p125
      %p132 = scmp.eq.s32.totalorder %s29, 9
      %p133 = por %p131, %p132
      %p134 = scmp.ne.s32.totalorder %s126, %s129
      %p135 = scmp.eq.s32.totalorder %s29, 0
      %p136 = por %p134, %p135
      %p137 = scmp.ne.s32.totalorder %s126, %s129
      %p138 = scmp.eq.s32.totalorder %s34, 9
      %p139 = por %p137, %p138
      %p140 = scmp.ne.s32.totalorder %s129, %s130
      %p141 = scmp.eq.s32.totalorder %s34, 0
      %p142 = por %p140, %p141
      %p143 = scmp.ne.s32.totalorder %s129, %s130
      %p144 = scmp.eq.s32.totalorder %s35, 9
      %p145 = por %p143, %p144
      %p147 = scmp.ne.s32.totalorder %s130, %s146
      %p148 = scmp.eq.s32.totalorder %s35, 0
      %p149 = por %p147, %p148
      %p150 = scmp.le.s32.totalorder 1, %s29
      %p151 = scmp.lt.s32.totalorder %s29, 11
      %p152 = pnand %p150, %p151
      %p153 = pneg %p152
      // Predicated region
      $region9: #{hex_patch_extract.1} parent=5 // pred_check
        _
      $region10: #{hex_patch_extract.1} parent=5 // pred_check_branch
        %155 = sbr.rel (%p152) target = $region12
      $region11: #{hex_patch_extract.1} parent=5 // pred_region
        %s156 = ssub.s32 %s29, 1
      $region12: #{hex_patch_extract.1} parent=5 // pred_fallthru
        _
      %p157 = scmp.lt.s32.totalorder %s29, 10
      // Predicated region
      $region13: #{hex_patch_extract.1} parent=5 // pred_check
        %p158 = pneg %p157
      $region14: #{hex_patch_extract.1} parent=5 // pred_check_branch
        %160 = sbr.rel (%p158) target = $region16
      $region15: #{hex_patch_extract.1} parent=5 // pred_region
        // Predicated region
        $region17: #{hex_patch_extract.1} parent=15 // pred_check
          %p161 = pneg %p76
        $region18: #{hex_patch_extract.1} parent=15 // pred_check_branch
          %163 = sbr.rel (%p161) target = $region20
        $region19: #{hex_patch_extract.1} parent=15 // pred_region
          %s164 = sand.u32 %s66, 1
          %s165 = sand.u32 %s66, 1
          %s166 = smul.addr %s165, 8
          %s167 = scalar_lea.vmem [#allocation6], %s166
          %s168 = smul.u32 %s37, 2
          %s169 = sadd.s32 %s168, %s38
          %s170 = sld [smem:[#allocation3 + %s169]]
          %s171 = smul.u32 2, %s36
          %s172 = smul.addr %s171, 2
          %s173 = sadd.s32 %s170, %s172
          %s174 = smul.addr %s173, 4
          %s175 = scalar_lea.vmem %s3, %s174
          // Predicated region
          $region21: #{hex_patch_extract.1} parent=19 // pred_check
            _
          $region22: #{hex_patch_extract.1} parent=19 // pred_check_branch
            %177 = sbr.rel (0) target = $region24
          $region23: #{hex_patch_extract.1} parent=19 // pred_region
            // Predicated region
            $region25: #{hex_patch_extract.1} parent=23 // pred_check
              _
            $region26: #{hex_patch_extract.1} parent=23 // pred_check_branch
              %179 = sbr.rel target = $region28
            $region27: #{hex_patch_extract.1} parent=23 // pred_region
              // Predicated region
              $region40: #{hex_patch_extract.1} parent=27 // pred_check
                _
              $region41: #{hex_patch_extract.1} parent=27 // pred_check_branch
                %197 = sbr.rel (0) target = $region43
              $region42: #{hex_patch_extract.1} parent=27 // pred_region
                loop: start=0, step=1, limit=1
                $region44: #{hex_patch_extract.1} parent=42 // loop_pre_header
                  _
                $region45: #{hex_patch_extract.1} parent=42 // loop_header
                  %s199 = sphi 0, %s203
                  %p200 = scmp.ge.s32.totalorder %s199, 1
                  %s204 = sphi %s175, %s175
                  %s205 = sphi %s167, %s167
                $region46: #{hex_patch_extract.1} parent=42 // loop_header_branch
                  %202 = sbr.rel (%p200) target = $region50
                $region47: #{hex_patch_extract.1} parent=42 // loop_body
                  _
                $region48: #{hex_patch_extract.1} parent=42 // loop_footer
                  %s203 = sadd.s32 1, %s199
                $region49: #{hex_patch_extract.1} parent=42 // loop_footer_branch
                  %198 = sbr.rel target = $region45
                $region50: #{hex_patch_extract.1} parent=42 // loop_exit
                  _
                %s207 = ssub.s32 16, 1
                loop: start=0, step=1, limit=1
                $region51: #{hex_patch_extract.1} parent=42 // loop_pre_header
                  _
                $region52: #{hex_patch_extract.1} parent=42 // loop_header
                  %s209 = sphi 0, %s213
                  %p210 = scmp.ge.s32.totalorder %s209, 1
                  %s214 = sphi %s175, %s175
                  %s215 = sphi %s167, %s167
                $region53: #{hex_patch_extract.1} parent=42 // loop_header_branch
                  %212 = sbr.rel (%p210) target = $region57
                $region54: #{hex_patch_extract.1} parent=42 // loop_body
                  %v216 = vld [vmem:[%s214] sm:%s207]
                  %217 = vst [vmem:[%s215] sm:%s207] %v216
                  %v218 = vld [vmem:[%s214 + $0x8] sm:%s207]
                  %219 = vst [vmem:[%s215 + $0x4] sm:%s207] %v218
                $region55: #{hex_patch_extract.1} parent=42 // loop_footer
                  %s213 = sadd.s32 1, %s209
                $region56: #{hex_patch_extract.1} parent=42 // loop_footer_branch
                  %208 = sbr.rel target = $region52
                $region57: #{hex_patch_extract.1} parent=42 // loop_exit
                  _
              $region43: #{hex_patch_extract.1} parent=27 // pred_fallthru
                _
            $region28: #{hex_patch_extract.1} parent=23 // pred_fallthru
              _
            // Predicated region
            $region29: #{hex_patch_extract.1} parent=23 // pred_check
              _
            $region30: #{hex_patch_extract.1} parent=23 // pred_check_branch
              %181 = sbr.rel (0) target = $region32
            $region31: #{hex_patch_extract.1} parent=23 // pred_region
              %s183 = ssub.s32 16, 1
              loop: start=0, step=1, limit=1
              $region33: #{hex_patch_extract.1} parent=31 // loop_pre_header
                _
              $region34: #{hex_patch_extract.1} parent=31 // loop_header
                %s185 = sphi 0, %s189
                %p186 = scmp.ge.s32.totalorder %s185, 1
                %s190 = sphi %s175, %s175
                %s191 = sphi %s167, %s167
              $region35: #{hex_patch_extract.1} parent=31 // loop_header_branch
                %188 = sbr.rel (%p186) target = $region39
              $region36: #{hex_patch_extract.1} parent=31 // loop_body
                %v192 = vld [vmem:[%s190] sm:%s183]
                %193 = vst [vmem:[%s191] sm:%s183] %v192
                %v194 = vld [vmem:[%s190 + $0x8] sm:%s183]
                %195 = vst [vmem:[%s191 + $0x4] sm:%s183] %v194
              $region37: #{hex_patch_extract.1} parent=31 // loop_footer
                %s189 = sadd.s32 1, %s185
              $region38: #{hex_patch_extract.1} parent=31 // loop_footer_branch
                %184 = sbr.rel target = $region34
              $region39: #{hex_patch_extract.1} parent=31 // loop_exit
                _
            $region32: #{hex_patch_extract.1} parent=23 // pred_fallthru
              _
          $region24: #{hex_patch_extract.1} parent=19 // pred_fallthru
            _
          %220 = vnop
        $region20: #{hex_patch_extract.1} parent=15 // pred_fallthru
          _
        // Predicated region
        $region58: #{hex_patch_extract.1} parent=15 // pred_check
          %p221 = pneg %p108
        $region59: #{hex_patch_extract.1} parent=15 // pred_check_branch
          %223 = sbr.rel (%p221) target = $region61
        $region60: #{hex_patch_extract.1} parent=15 // pred_region
          %s224 = smul.u32 %s37, 2
          %s225 = sadd.s32 %s224, %s38
          %s226 = sld [smem:[#allocation4 + %s225]]
          %s227 = smul.u32 16, %s226
          %p228 = scmp.lt.s32.totalorder %s227, 95
          %s229 = scalar_select %p228, %s227, 95
          %s230 = smul.addr %s229, 4
          %s231 = scalar_lea.vmem %s4, %s230
          %s232 = smul.u32 %s37, 2
          %s233 = sadd.s32 %s232, %s38
          %s234 = sld [smem:[#allocation4 + %s233]]
          %s235 = smul.u32 16, %s234
        $region61: #{hex_patch_extract.1} parent=15 // pred_fallthru
          _
      $region16: #{hex_patch_extract.1} parent=5 // pred_fallthru
        _
      %p236 = scmp.le.s32.totalorder 1, %s29
      %p237 = scmp.lt.s32.totalorder %s29, 11
      %p238 = pnand %p236, %p237
      %p239 = pneg %p238
      // Predicated region
      $region62: #{hex_patch_extract.1} parent=5 // pred_check
        _
      $region63: #{hex_patch_extract.1} parent=5 // pred_check_branch
        %241 = sbr.rel (%p238) target = $region65
      $region64: #{hex_patch_extract.1} parent=5 // pred_region
        %s242 = ssub.s32 %s29, 1
        %s243 = sand.u32 %s69, 1
        %s244 = sand.u32 %s69, 1
        %s245 = smul.addr %s244, 8
        %s246 = scalar_lea.vmem [#allocation6], %s245
        // Predicated region
        $region66: #{hex_patch_extract.1} parent=64 // pred_check
          %p247 = pneg %p82
        $region67: #{hex_patch_extract.1} parent=64 // pred_check_branch
          %249 = sbr.rel (%p247) target = $region69
        $region68: #{hex_patch_extract.1} parent=64 // pred_region
          _
        $region69: #{hex_patch_extract.1} parent=64 // pred_fallthru
          _
        %s250 = sand.u32 %s69, 1
        %s251 = sand.u32 %s69, 1
        %s252 = smul.addr %s251, 8
        %s253 = scalar_lea.vmem [#allocation6], %s252
        %p254 = pneg %p82
        %p255 = pneg %p79
        %s256 = smul.u32 %s40, 2
        %s257 = sadd.s32 %s256, %s41
        %s258 = sld [smem:[#allocation4 + %s257]]
        %s259 = smul.u32 16, %s258
        %p260 = scmp.lt.s32.totalorder %s259, 95
        %s261 = scalar_select %p260, %s259, 95
        %s262 = smul.addr %s261, 4
        %s263 = scalar_lea.vmem %s4, %s262
        %p264 = pneg %p114
        %p265 = pneg %p111
        %p266 = pneg %p142
        %p267 = pneg %p139
        %s268 = sand.u32 %s129, 1
        %s269 = sand.u32 %s129, 1
        %s270 = smul.addr %s269, 16
        %s271 = scalar_lea.vmem [#allocation7], %s270
        %s272 = smul.u32 %s40, 2
        %s273 = sadd.s32 %s272, %s41
        %s274 = sld [smem:[#allocation3 + %s273]]
        %s275 = smul.u32 2, %s39
        %s276 = smul.u32 %s40, 2
        %s277 = sadd.s32 %s276, %s41
        %s278 = sld [smem:[#allocation4 + %s277]]
        %s279 = smul.u32 16, %s278
        %p280 = scmp.lt.s32.totalorder %s279, 95
        %s281 = scalar_select %p280, %s279, 95
        %s282 = smul.addr %s281, 4
        %s283 = scalar_lea.vmem %s4, %s282
        %s284 = smul.u32 %s40, 2
        %s285 = sadd.s32 %s284, %s41
        %s286 = sld [smem:[#allocation4 + %s285]]
        %s287 = smul.u32 16, %s286
        %s288 = smul.u32 2, %s39
        %p289 = scmp.eq.s32.totalorder %s41, 0
        // Predicated region
        $region70: #{hex_patch_extract.1} parent=64 // pred_check
          %p290 = pneg %p289
        $region71: #{hex_patch_extract.1} parent=64 // pred_check_branch
          %292 = sbr.rel (%p290) target = $region73
        $region72: #{hex_patch_extract.1} parent=64 // pred_region
          %293 = vst [vmem:[%s271] sm:$0xff] 0.0
          %294 = vst [vmem:[%s271 + $0x8] sm:$0xff] 0.0
        $region73: #{hex_patch_extract.1} parent=64 // pred_fallthru
          _
        %s295 = sld [smem:[#allocation5 + %s40]]
        %p296 = scmp.lt.s32.totalorder %s41, %s295
        // Predicated region
        $region74: #{hex_patch_extract.1} parent=64 // pred_check
          %p297 = pneg %p296
        $region75: #{hex_patch_extract.1} parent=64 // pred_check_branch
          %299 = sbr.rel (%p297) target = $region77
        $region76: #{hex_patch_extract.1} parent=64 // pred_region
          %v300 = vld [vmem:[%s271] sm:$0xff]
          %v301 = vld [vmem:[%s271 + $0x8] sm:$0xff]
          %v302 = vld [vmem:[%s246] sm:$0xf]
          %v303 = vld [vmem:[%s246 + $0x4] sm:$0xf]
          %v304 = vld [vmem:[%s283] sm:$0xf]
          %v305 = vld [vmem:[%s283 + $0x4] sm:$0xf]
          %v306 = vld [vmem:[%s283 + $0x8] sm:$0xf]
          %v307 = vld [vmem:[%s283 + $0xc] sm:$0xf]
          %v308 = vld [vmem:[%s283 + $0x10] sm:$0xf]
          %v309 = vld [vmem:[%s283 + $0x14] sm:$0xf]
          %v310 = vld [vmem:[%s283 + $0x18] sm:$0xf]
          %v311 = vld [vmem:[%s283 + $0x1c] sm:$0xf]
          %v312 = vld [vmem:[%s283 + $0x20] sm:$0xf]
          %v313 = vld [vmem:[%s283 + $0x24] sm:$0xf]
          %v314 = vld [vmem:[%s283 + $0x28] sm:$0xf]
          %v315 = vld [vmem:[%s283 + $0x2c] sm:$0xf]
          %v316 = vld [vmem:[%s283 + $0x30] sm:$0xf]
          %v317 = vld [vmem:[%s283 + $0x34] sm:$0xf]
          %v318 = vld [vmem:[%s283 + $0x38] sm:$0xf]
          %v319 = vld [vmem:[%s283 + $0x3c] sm:$0xf]
          %v322 = vunpack.c.l.b16 %v302
          %v323 = vunpack.c.l.b16 %v303
          %v324 = vpack.c.b16 %v323, %v322
          %v342 = vunpack.c.l.b16 %v304
          %v343 = vunpack.c.l.b16 %v305
          %v344 = vunpack.c.l.b16 %v306
          %v345 = vunpack.c.l.b16 %v307
          %v346 = vunpack.c.l.b16 %v308
          %v347 = vunpack.c.l.b16 %v309
          %v348 = vunpack.c.l.b16 %v310
          %v349 = vunpack.c.l.b16 %v311
          %v350 = vunpack.c.l.b16 %v312
          %v351 = vunpack.c.l.b16 %v313
          %v352 = vunpack.c.l.b16 %v314
          %v353 = vunpack.c.l.b16 %v315
          %v354 = vunpack.c.l.b16 %v316
          %v355 = vunpack.c.l.b16 %v317
          %v356 = vunpack.c.l.b16 %v318
          %v357 = vunpack.c.l.b16 %v319
          %v358 = vpack.c.b16 %v343, %v342
          %v359 = vpack.c.b16 %v345, %v344
          %v360 = vpack.c.b16 %v347, %v346
          %v361 = vpack.c.b16 %v349, %v348
          %v362 = vpack.c.b16 %v351, %v350
          %v363 = vpack.c.b16 %v353, %v352
          %v364 = vpack.c.b16 %v355, %v354
          %v365 = vpack.c.b16 %v357, %v356
          %374 = vmatpush.bf16.msra.mxu0 %v365
          %375 = vmatpush.bf16.msra.mxu0 %v364
          %376 = vmatpush.bf16.msra.mxu0 %v363
          %377 = vmatpush.bf16.msra.mxu0 %v362
          %378 = vmatpush.bf16.msra.mxu0 %v361
          %379 = vmatpush.bf16.msra.mxu0 %v360
          %380 = vmatpush.bf16.msra.mxu0 %v359
          %381 = vmatpush.bf16.msra.mxu0 %v358
          %382 = vmatmul.bf16.gmra.mxu0 %v324
          %v383 = vpop.f32.mrf.mxu0
          %v384 = vadd.f32 0.0, %v383
          %v385 = vpop.f32.mrf.mxu0
          %v386 = vadd.f32 0.0, %v385
          %387 = vdwg.mxu0
          %v388 = vadd.f32 %v300, %v384
          %v389 = vadd.f32 %v301, %v386
          %390 = vst [vmem:[%s271] sm:$0xff] %v388
          %391 = vst [vmem:[%s271 + $0x8] sm:$0xff] %v389
        $region77: #{hex_patch_extract.1} parent=64 // pred_fallthru
          _
        %s392 = sand.u32 %s129, 1
        %s393 = sand.u32 %s129, 1
        %s394 = smul.addr %s393, 16
        %s395 = scalar_lea.vmem [#allocation7], %s394
        // Predicated region
        $region78: #{hex_patch_extract.1} parent=64 // pred_check
          %p396 = pneg %p139
        $region79: #{hex_patch_extract.1} parent=64 // pred_check_branch
          %398 = sbr.rel (%p396) target = $region81
        $region80: #{hex_patch_extract.1} parent=64 // pred_region
          %s399 = smul.u32 2, %s39
          %s400 = smul.addr %s399, 5
          %s401 = sadd.s32 %s40, %s400
          %s402 = smul.addr %s401, 8
          %s403 = scalar_lea.vmem %s5, %s402
          // Predicated region
          $region82: #{hex_patch_extract.1} parent=80 // pred_check
            _
          $region83: #{hex_patch_extract.1} parent=80 // pred_check_branch
            %405 = sbr.rel (0) target = $region85
          $region84: #{hex_patch_extract.1} parent=80 // pred_region
            // Predicated region
            $region86: #{hex_patch_extract.1} parent=84 // pred_check
              _
            $region87: #{hex_patch_extract.1} parent=84 // pred_check_branch
              %407 = sbr.rel (0) target = $region89
            $region88: #{hex_patch_extract.1} parent=84 // pred_region
              // Predicated region
              $region101: #{hex_patch_extract.1} parent=88 // pred_check
                _
              $region102: #{hex_patch_extract.1} parent=88 // pred_check_branch
                %425 = sbr.rel (0) target = $region104
              $region103: #{hex_patch_extract.1} parent=88 // pred_region
                loop: start=0, step=1, limit=1
                $region105: #{hex_patch_extract.1} parent=103 // loop_pre_header
                  _
                $region106: #{hex_patch_extract.1} parent=103 // loop_header
                  %s427 = sphi 0, %s431
                  %p428 = scmp.ge.s32.totalorder %s427, 1
                  %s432 = sphi %s395, %s395
                  %s433 = sphi %s403, %s403
                $region107: #{hex_patch_extract.1} parent=103 // loop_header_branch
                  %430 = sbr.rel (%p428) target = $region111
                $region108: #{hex_patch_extract.1} parent=103 // loop_body
                  %v434 = vld [vmem:[%s432] sm:$0xff]
                  %435 = vst [vmem:[%s433] sm:$0xff] %v434
                  %v436 = vld [vmem:[%s432 + $0x8] sm:$0xff]
                  %437 = vst [vmem:[%s433 + $0x28] sm:$0xff] %v436
                $region109: #{hex_patch_extract.1} parent=103 // loop_footer
                  %s431 = sadd.s32 1, %s427
                $region110: #{hex_patch_extract.1} parent=103 // loop_footer_branch
                  %426 = sbr.rel target = $region106
                $region111: #{hex_patch_extract.1} parent=103 // loop_exit
                  _
              $region104: #{hex_patch_extract.1} parent=88 // pred_fallthru
                _
              // Predicated region
              $region112: #{hex_patch_extract.1} parent=88 // pred_check
                _
              $region113: #{hex_patch_extract.1} parent=88 // pred_check_branch
                %439 = sbr.rel target = $region115
              $region114: #{hex_patch_extract.1} parent=88 // pred_region
                _
              $region115: #{hex_patch_extract.1} parent=88 // pred_fallthru
                _
            $region89: #{hex_patch_extract.1} parent=84 // pred_fallthru
              _
            // Predicated region
            $region90: #{hex_patch_extract.1} parent=84 // pred_check
              _
            $region91: #{hex_patch_extract.1} parent=84 // pred_check_branch
              %409 = sbr.rel target = $region93
            $region92: #{hex_patch_extract.1} parent=84 // pred_region
              %s411 = ssub.s32 256, 1
              loop: start=0, step=1, limit=1
              $region94: #{hex_patch_extract.1} parent=92 // loop_pre_header
                _
              $region95: #{hex_patch_extract.1} parent=92 // loop_header
                %s413 = sphi 0, %s417
                %p414 = scmp.ge.s32.totalorder %s413, 1
                %s418 = sphi %s395, %s395
                %s419 = sphi %s403, %s403
              $region96: #{hex_patch_extract.1} parent=92 // loop_header_branch
                %416 = sbr.rel (%p414) target = $region100
              $region97: #{hex_patch_extract.1} parent=92 // loop_body
                %v420 = vld [vmem:[%s418] sm:%s411]
                %421 = vst [vmem:[%s419] sm:%s411] %v420
                %v422 = vld [vmem:[%s418 + $0x8] sm:%s411]
                %423 = vst [vmem:[%s419 + $0x28] sm:%s411] %v422
              $region98: #{hex_patch_extract.1} parent=92 // loop_footer
                %s417 = sadd.s32 1, %s413
              $region99: #{hex_patch_extract.1} parent=92 // loop_footer_branch
                %412 = sbr.rel target = $region95
              $region100: #{hex_patch_extract.1} parent=92 // loop_exit
                _
            $region93: #{hex_patch_extract.1} parent=84 // pred_fallthru
              _
          $region85: #{hex_patch_extract.1} parent=80 // pred_fallthru
            _
          %440 = vnop
        $region81: #{hex_patch_extract.1} parent=64 // pred_fallthru
          _
      $region65: #{hex_patch_extract.1} parent=5 // pred_fallthru
        _
      %p441 = scmp.le.s32.totalorder 2, %s29
      // Predicated region
      $region116: #{hex_patch_extract.1} parent=5 // pred_check
        %p442 = pneg %p441
      $region117: #{hex_patch_extract.1} parent=5 // pred_check_branch
        %444 = sbr.rel (%p442) target = $region119
      $region118: #{hex_patch_extract.1} parent=5 // pred_region
        %s445 = ssub.s32 %s29, 2
        // Predicated region
        $region120: #{hex_patch_extract.1} parent=118 // pred_check
          %p446 = pneg %p145
        $region121: #{hex_patch_extract.1} parent=118 // pred_check_branch
          %448 = sbr.rel (%p446) target = $region123
        $region122: #{hex_patch_extract.1} parent=118 // pred_region
          %s449 = sand.u32 %s130, 1
          %s450 = sand.u32 %s130, 1
          %s451 = smul.addr %s450, 16
          %s452 = scalar_lea.vmem [#allocation7], %s451
        $region123: #{hex_patch_extract.1} parent=118 // pred_fallthru
          _
      $region119: #{hex_patch_extract.1} parent=5 // pred_fallthru
        _
    $region6: #{hex_patch_extract.1} parent=1 // loop_footer
      %s33 = sadd.s32 1, %s29
    $region7: #{hex_patch_extract.1} parent=1 // loop_footer_branch
      %28 = sbr.rel target = $region3
    $region8: #{hex_patch_extract.1} parent=1 // loop_exit
      _

</llo_original>
